<compile_context>
chip_gen: v6e
topology: v6e:2x2x1
jax: 0.10.0
libtpu: 0.0.40
codegen_flags: <defaults>
</compile_context>

<pallas_src>
import jax
import jax.numpy as jnp
from jax import lax
from jax.experimental import pallas as pl
from jax.experimental.pallas import tpu as pltpu


def _round_up(x, m):
    return (x + m - 1) // m * m


def _num_tensorcores():
    """2 for multi-TensorCore chips (v7x, and megacore v4/v5p), else 1."""
    try:
        kind = jax.devices()[0].device_kind.lower().replace(" ", "")
    except Exception:
        return 1
    if "v7" in kind or "tpu7" in kind or "v5p" in kind or "v4" in kind:
        return 2
    return 1


def mlp_kernel(x_ref, w1_ref, b1_ref, w2_ref, b2_ref, w3_ref, b3_ref, o_ref):
    """Fused fc1 -> ReLU -> (dropout=id) -> fc2 -> ReLU -> (dropout=id) -> fc3.

      x_ref  : (TB, D)  f32    streamed per grid step (cast to bf16 in-kernel)
      w1_ref : (H1, D)  bf16   grid-invariant (PyTorch fc1.weight layout)
      b1_ref : (H1, 1)  f32
      w2_ref : (H2, H1) bf16
      b2_ref : (H2, 1)  f32
      w3_ref : (H2, 1)  f32    fc3.weight as a column
      b3_ref : (1, 1)   f32    scalar, SMEM
      o_ref  : (1, TB)  f32    lane-dense output row (batch on lanes)
    """
    # Cast the streamed operand in-kernel (avoids a separate wrapper HBM pass).
    x_bf = x_ref[...].astype(jnp.bfloat16)                      # (TB, D)

    # fc1 on the MXU: contract the D axis of both operands -> (H1, TB);
    # only the tiny (TB, 32) operand needs an in-VMEM transpose (XLU).
    h1 = lax.dot_general(w1_ref[...], x_bf, (((1,), (1,)), ((), ())),
                         preferred_element_type=jnp.float32)
    # bias + ReLU in f32 (safe on v5e: no bf16 VPU), single bf16 cast for fc2.
    h1 = jnp.maximum(h1 + b1_ref[...], 0.0).astype(jnp.bfloat16)  # (H1, TB)
    # dropout1: identity (eval/inference semantics)

    # fc2 on the MXU.
    h2 = jnp.dot(w2_ref[...], h1, preferred_element_type=jnp.float32)
    h2 = jnp.maximum(h2 + b2_ref[...], 0.0)                       # (H2, TB)
    # dropout2: identity (eval/inference semantics)

    # fc3 has out_features=1: VPU multiply + sublane reduction instead of an
    # N=1 MXU matmul; keeps the output a lane-dense (1, TB) row.
    o = jnp.sum(h2 * w3_ref[...], axis=0, keepdims=True) + b3_ref[0, 0]
    o_ref[...] = o.astype(o_ref.dtype)                            # (1, TB)


def mlp_forward(x, params, *, tile_b=None):
    """x: [B, D] float32 (or [1, B, D], squeezed like the PyTorch module).
    Returns [B] float32, matching MLPModel.forward (eval mode)."""
    if x.ndim == 3 and x.shape[0] == 1:
        x = jnp.squeeze(x, 0)
    # PyTorch layouts: w1 (H1, D), b1 (H1,), w2 (H2, H1), b2 (H2,), w3 (1, H2), b3 (1,)
    w1, b1, w2, b2, w3, b3 = params
    B, D = x.shape
    H1, H2 = w1.shape[0], w2.shape[0]

    # ---- tiling: large lane-aligned batch tiles; split across cores only on
    #      multi-TensorCore parts (v7x / v4 / v5p). VMEM per step at TB=4096 is
    #      ~10 MiB, well under the explicit 48 MiB limit below.
    TILE_CAP = 4096
    if tile_b is None:
        num_tc = _num_tensorcores()
        pb128 = _round_up(B, 128)
        if num_tc > 1 and pb128 >= 256:
            per_core = _round_up(pl.cdiv(pb128, num_tc), 128)
            tile_b = min(TILE_CAP, max(128, per_core))
        else:
            tile_b = min(TILE_CAP, pb128)
    assert tile_b % 128 == 0 and tile_b > 0
    padded_b = _round_up(B, tile_b)
    grid = (padded_b // tile_b,)

    # ---- operands. x is NOT transposed and NOT cast in the wrapper; it is only
    #      zero-padded along batch when B is not already tile-aligned.
    if padded_b != B:
        x = jnp.pad(x, ((0, padded_b - B), (0, 0)))
    x = x.astype(jnp.float32)
    w1_b = w1.astype(jnp.bfloat16)                       # (H1, D)
    w2_b = w2.astype(jnp.bfloat16)                       # (H2, H1)
    b1_c = b1.reshape(H1, 1).astype(jnp.float32)         # (H1, 1)
    b2_c = b2.reshape(H2, 1).astype(jnp.float32)         # (H2, 1)
    w3_c = w3.reshape(1, H2).T.astype(jnp.float32)       # (H2, 1)
    b3_s = b3.reshape(1, 1).astype(jnp.float32)          # (1, 1) scalar -> SMEM

    flops = 2 * B * (D * H1 + H1 * H2 + H2)
    bytes_accessed = (x.size * 4 + w1_b.size * 2 + w2_b.size * 2
                      + (b1_c.size + b2_c.size + w3_c.size + 1) * 4
                      + padded_b * 4)

    out = pl.pallas_call(
        mlp_kernel,
        out_shape=jax.ShapeDtypeStruct((1, padded_b), jnp.float32),
        grid_spec=pltpu.PrefetchScalarGridSpec(
            num_scalar_prefetch=0,
            grid=grid,
            in_specs=[
                pl.BlockSpec((tile_b, D), lambda i: (i, 0)),        # x (streamed)
                pl.BlockSpec((H1, D), lambda i: (0, 0)),            # W1 (invariant)
                pl.BlockSpec((H1, 1), lambda i: (0, 0)),            # b1
                pl.BlockSpec((H2, H1), lambda i: (0, 0)),           # W2
                pl.BlockSpec((H2, 1), lambda i: (0, 0)),            # b2
                pl.BlockSpec((H2, 1), lambda i: (0, 0)),            # W3 column
                pl.BlockSpec(memory_space=pltpu.MemorySpace.SMEM),  # b3 scalar
            ],
            out_specs=pl.BlockSpec((1, tile_b), lambda i: (0, i)),  # lane-dense
        ),
        compiler_params=pltpu.CompilerParams(
            dimension_semantics=("parallel",),
            vmem_limit_bytes=48 * 1024 * 1024,
        ),
        cost_estimate=pl.CostEstimate(
            flops=flops, transcendentals=0, bytes_accessed=bytes_accessed),
    )(x, w1_b, b1_c, w2_b, b2_c, w3_c, b3_s)

    return out[0, :B]  # drop batch padding; matches .squeeze(-1) -> [B]


def init_params(key, input_dim, hidden_dim1=256, hidden_dim2=128):
    """Deterministic init; shapes match the PyTorch nn.Linear layers
    (weight: [out, in], bias: [out])."""
    k1, k2, k3, k4, k5, k6 = jax.random.split(key, 6)
    s1 = 1.0 / float(jnp.sqrt(jnp.float32(input_dim)))
    s2 = 1.0 / float(jnp.sqrt(jnp.float32(hidden_dim1)))
    s3 = 1.0 / float(jnp.sqrt(jnp.float32(hidden_dim2)))
    w1 = jax.random.uniform(k1, (hidden_dim1, input_dim), jnp.float32, -s1, s1)
    b1 = jax.random.uniform(k2, (hidden_dim1,), jnp.float32, -s1, s1)
    w2 = jax.random.uniform(k3, (hidden_dim2, hidden_dim1), jnp.float32, -s2, s2)
    b2 = jax.random.uniform(k4, (hidden_dim2,), jnp.float32, -s2, s2)
    w3 = jax.random.uniform(k5, (1, hidden_dim2), jnp.float32, -s3, s3)
    b3 = jax.random.uniform(k6, (1,), jnp.float32, -s3, s3)
    return (w1, b1, w2, b2, w3, b3)


if __name__ == "__main__":
    key = jax.random.PRNGKey(0)
    k_param, k_x = jax.random.split(key)

    batch, input_dim = 16, 32
    params = init_params(k_param, input_dim)
    x = jax.random.normal(k_x, (batch, input_dim), jnp.float32)

    y = mlp_forward(x, params)
    y = jax.block_until_ready(y)

    # pure-JAX f32 reference (kernel uses bf16 MXU operands -> loose tolerance)
    w1, b1, w2, b2, w3, b3 = params
    ref = jnp.maximum(x @ w1.T + b1, 0.0)
    ref = jnp.maximum(ref @ w2.T + b2, 0.0)
    ref = (ref @ w3.T + b3).squeeze(-1)

    assert y.shape == (batch,), y.shape
    assert jnp.allclose(y, ref, atol=2e-2, rtol=2e-2), (
        float(jnp.max(jnp.abs(y - ref))))

    print("KERNEL_OK")
</pallas_src>

<mosaic_0001>
module attributes {stable_mosaic.version = 11 : i64} {
  func.func @mlp_kernel(%arg0: i32, %arg1: memref<128x32xf32, #tpu.memory_space<vmem>>, %arg2: memref<256x32xbf16, #tpu.memory_space<vmem>>, %arg3: memref<256x1xf32, #tpu.memory_space<vmem>>, %arg4: memref<128x256xbf16, #tpu.memory_space<vmem>>, %arg5: memref<128x1xf32, #tpu.memory_space<vmem>>, %arg6: memref<128x1xf32, #tpu.memory_space<vmem>>, %arg7: memref<1x1xf32, #tpu.memory_space<smem>>, %arg8: memref<1x128xf32, #tpu.memory_space<vmem>>) attributes {dimension_semantics = [#tpu.dimension_semantics<parallel>], iteration_bounds = array<i64: 1>, scalar_prefetch = 0 : i64, scratch_operands = 0 : i64, tpu.core_type = #tpu.core_type<tc>, window_params = [{transform_indices = @transform_0, window_bounds = array<i64: 128, 32>}, {pipeline_mode = #tpu.pipeline_mode<synchronous>, transform_indices = @transform_1, window_bounds = array<i64: 256, 32>}, {pipeline_mode = #tpu.pipeline_mode<synchronous>, transform_indices = @transform_2, window_bounds = array<i64: 256, 1>}, {pipeline_mode = #tpu.pipeline_mode<synchronous>, transform_indices = @transform_3, window_bounds = array<i64: 128, 256>}, {pipeline_mode = #tpu.pipeline_mode<synchronous>, transform_indices = @transform_4, window_bounds = array<i64: 128, 1>}, {pipeline_mode = #tpu.pipeline_mode<synchronous>, transform_indices = @transform_5, window_bounds = array<i64: 128, 1>}, {transform_indices = @transform_6, window_bounds = array<i64: 1, 1>}, {transform_indices = @transform_7, window_bounds = array<i64: 1, 128>}]} {
    %c0 = arith.constant 0 : index
    %c0_0 = arith.constant 0 : index
    %0 = vector.load %arg1[%c0, %c0_0] : memref<128x32xf32, #tpu.memory_space<vmem>>, vector<128x32xf32>
    %1 = arith.truncf %0 : vector<128x32xf32> to vector<128x32xbf16>
    %c0_1 = arith.constant 0 : index
    %c0_2 = arith.constant 0 : index
    %2 = vector.load %arg2[%c0_1, %c0_2] : memref<256x32xbf16, #tpu.memory_space<vmem>>, vector<256x32xbf16>
    %cst = arith.constant dense<0.000000e+00> : vector<256x128xf32>
    %3 = tpu.matmul %2, %1, %cst {dimension_numbers = #tpu.dot_dimension_numbers<[1], [1], [0], [0], [0, 0, 1, 0], [], []>} : vector<256x32xbf16>, vector<128x32xbf16>, vector<256x128xf32> -> vector<256x128xf32>
    %c0_3 = arith.constant 0 : index
    %c0_4 = arith.constant 0 : index
    %4 = vector.load %arg3[%c0_3, %c0_4] : memref<256x1xf32, #tpu.memory_space<vmem>>, vector<256x1xf32>
    %5 = vector.broadcast %4 : vector<256x1xf32> to vector<256x128xf32>
    %6 = arith.addf %3, %5 : vector<256x128xf32>
    %cst_5 = arith.constant 0.000000e+00 : f32
    %7 = vector.broadcast %cst_5 : f32 to vector<256x128xf32>
    %8 = arith.maximumf %6, %7 : vector<256x128xf32>
    %9 = arith.truncf %8 : vector<256x128xf32> to vector<256x128xbf16>
    %c0_6 = arith.constant 0 : index
    %c0_7 = arith.constant 0 : index
    %10 = vector.load %arg4[%c0_6, %c0_7] : memref<128x256xbf16, #tpu.memory_space<vmem>>, vector<128x256xbf16>
    %cst_8 = arith.constant dense<0.000000e+00> : vector<128x128xf32>
    %11 = tpu.matmul %10, %9, %cst_8 {dimension_numbers = #tpu.dot_dimension_numbers<[1], [0], [0], [1], [0, 0, 1, 1], [], []>} : vector<128x256xbf16>, vector<256x128xbf16>, vector<128x128xf32> -> vector<128x128xf32>
    %c0_9 = arith.constant 0 : index
    %c0_10 = arith.constant 0 : index
    %12 = vector.load %arg5[%c0_9, %c0_10] : memref<128x1xf32, #tpu.memory_space<vmem>>, vector<128x1xf32>
    %13 = vector.broadcast %12 : vector<128x1xf32> to vector<128x128xf32>
    %14 = arith.addf %11, %13 : vector<128x128xf32>
    %cst_11 = arith.constant 0.000000e+00 : f32
    %15 = vector.broadcast %cst_11 : f32 to vector<128x128xf32>
    %16 = arith.maximumf %14, %15 : vector<128x128xf32>
    %c0_12 = arith.constant 0 : index
    %c0_13 = arith.constant 0 : index
    %17 = vector.load %arg6[%c0_12, %c0_13] : memref<128x1xf32, #tpu.memory_space<vmem>>, vector<128x1xf32>
    %18 = vector.broadcast %17 : vector<128x1xf32> to vector<128x128xf32>
    %19 = arith.mulf %16, %18 : vector<128x128xf32>
    %cst_14 = arith.constant dense<0.000000e+00> : vector<128xf32>
    %20 = vector.multi_reduction <add>, %19, %cst_14 [0] : vector<128x128xf32> to vector<128xf32>
    %21 = vector.shape_cast %20 : vector<128xf32> to vector<1x128xf32>
    %c0_15 = arith.constant 0 : index
    %c0_16 = arith.constant 0 : index
    %22 = memref.load %arg7[%c0_15, %c0_16] : memref<1x1xf32, #tpu.memory_space<smem>>
    %23 = vector.broadcast %22 : f32 to vector<1x128xf32>
    %24 = arith.addf %21, %23 : vector<1x128xf32>
    %c0_17 = arith.constant 0 : index
    %c0_18 = arith.constant 0 : index
    %25 = vector.load %arg8[%c0_17, %c0_18] : memref<1x128xf32, #tpu.memory_space<vmem>>, vector<1x128xf32>
    tpu.vector_store %arg8[%c0_17, %c0_18], %24 {strides = array<i32>} : memref<1x128xf32, #tpu.memory_space<vmem>>, vector<1x128xf32>,
    return
  }
  func.func @transform_0(%arg0: i32) -> (i32, i32) {
    %c0_i32 = arith.constant 0 : i32
    %c0_i32_0 = arith.constant 0 : i32
    return %arg0, %c0_i32 : i32, i32
  }
  func.func @transform_1(%arg0: i32) -> (i32, i32) {
    %c0_i32 = arith.constant 0 : i32
    %c0_i32_0 = arith.constant 0 : i32
    %c0_i32_1 = arith.constant 0 : i32
    return %c0_i32, %c0_i32_0 : i32, i32
  }
  func.func @transform_2(%arg0: i32) -> (i32, i32) {
    %c0_i32 = arith.constant 0 : i32
    %c0_i32_0 = arith.constant 0 : i32
    %c0_i32_1 = arith.constant 0 : i32
    return %c0_i32, %c0_i32_0 : i32, i32
  }
  func.func @transform_3(%arg0: i32) -> (i32, i32) {
    %c0_i32 = arith.constant 0 : i32
    %c0_i32_0 = arith.constant 0 : i32
    %c0_i32_1 = arith.constant 0 : i32
    return %c0_i32, %c0_i32_0 : i32, i32
  }
  func.func @transform_4(%arg0: i32) -> (i32, i32) {
    %c0_i32 = arith.constant 0 : i32
    %c0_i32_0 = arith.constant 0 : i32
    %c0_i32_1 = arith.constant 0 : i32
    return %c0_i32, %c0_i32_0 : i32, i32
  }
  func.func @transform_5(%arg0: i32) -> (i32, i32) {
    %c0_i32 = arith.constant 0 : i32
    %c0_i32_0 = arith.constant 0 : i32
    %c0_i32_1 = arith.constant 0 : i32
    return %c0_i32, %c0_i32_0 : i32, i32
  }
  func.func @transform_6(%arg0: i32) -> (i32, i32) {
    %c0_i32 = arith.constant 0 : i32
    %c0_i32_0 = arith.constant 0 : i32
    %c0_i32_1 = arith.constant 0 : i32
    return %c0_i32, %c0_i32_0 : i32, i32
  }
  func.func @transform_7(%arg0: i32) -> (i32, i32) {
    %c0_i32 = arith.constant 0 : i32
    %c0_i32_0 = arith.constant 0 : i32
    return %c0_i32, %arg0 : i32, i32
  }
}

</mosaic_0001>

<llo_original>
// kernel: tpu_custom_call.1
$region0: #{tpu_custom_call.1}
  #allocation0 [shape = 'u32[]', space=smem, size = 0x4, offset = 0x4, fixed_abs, tag = 'smem constant byte address 0x4 - core index']
  #allocation1 [shape = 'u32[144,128]{1,0:T(1,128)}', space=vmem, size = 0x12000, scoped, tag = 'internal scratch']
  #allocation2 [shape = 'f32[1,1]{1,0:T(1,128)S(6)}', space=smem, size = 0x200, scoped, tag = 'scoped memory for tpu_custom_call.1']
  %s0 = inlined_call_operand.vmem [shape: f32[128,32], index: 0, kind: input, shape index: {}]
  %s1 = inlined_call_operand.vmem [shape: bf16[256,32], index: 1, kind: input, shape index: {}]
  %s2 = inlined_call_operand.vmem [shape: f32[256,1], index: 2, kind: input, shape index: {}]
  %s3 = inlined_call_operand.vmem [shape: bf16[128,256], index: 3, kind: input, shape index: {}]
  %s4 = inlined_call_operand.vmem [shape: f32[128,1], index: 4, kind: input, shape index: {}]
  %s5 = inlined_call_operand.vmem [shape: f32[128,1], index: 5, kind: input, shape index: {}]
  %s6 = inlined_call_operand.<no memory space> [shape: f32[1,1], index: 6, kind: input, shape index: {}]
  %s7 = inlined_call_operand.hbm [shape: f32[1,128], index: 7, kind: output, shape index: {}]
  %s8 = sld [smem:[#allocation0]]
  $region38: #{tpu_custom_call.1} parent=0
    _
  %s10 = ssub.s32 1, %s8
  %s11 = scalar_select 0, %s10, %s8
  %12 = sst [smem:[#allocation2]] %s6
  $region1: #{tpu_custom_call.1} parent=0
    #allocation3 [shape = 'u8[512]{0}', space=vmem, size = 0x400, scoped, tag = 'output window, operand 0, single buffered']
    #allocation4 [shape = 's32[1]{0}', space=sflag, size = 0x4, scoped, tag = 'scoped memory for tpu_custom_call.1']
    %13 = vsyncpa [#allocation4], 0
    // Predicated region
    $region2: #{tpu_custom_call.1} parent=1 // pred_check
      _
    $region3: #{tpu_custom_call.1} parent=1 // pred_check_branch
      %15 = sbr.rel (0) target = $region5
    $region4: #{tpu_custom_call.1} parent=1 // pred_region
      _
    $region5: #{tpu_custom_call.1} parent=1 // pred_fallthru
      _
    // Predicated region
    $region6: #{tpu_custom_call.1} parent=1 // pred_check
      _
    $region7: #{tpu_custom_call.1} parent=1 // pred_check_branch
      %17 = sbr.rel (0) target = $region9
    $region8: #{tpu_custom_call.1} parent=1 // pred_region
      _
    $region9: #{tpu_custom_call.1} parent=1 // pred_fallthru
      _
    // Predicated region
    $region10: #{tpu_custom_call.1} parent=1 // pred_check
      _
    $region11: #{tpu_custom_call.1} parent=1 // pred_check_branch
      %19 = sbr.rel (0) target = $region13
    $region12: #{tpu_custom_call.1} parent=1 // pred_region
      _
    $region13: #{tpu_custom_call.1} parent=1 // pred_fallthru
      _
    // Predicated region
    $region14: #{tpu_custom_call.1} parent=1 // pred_check
      _
    $region15: #{tpu_custom_call.1} parent=1 // pred_check_branch
      %21 = sbr.rel (0) target = $region17
    $region16: #{tpu_custom_call.1} parent=1 // pred_region
      _
    $region17: #{tpu_custom_call.1} parent=1 // pred_fallthru
      _
    // Predicated region
    $region18: #{tpu_custom_call.1} parent=1 // pred_check
      _
    $region19: #{tpu_custom_call.1} parent=1 // pred_check_branch
      %23 = sbr.rel (0) target = $region21
    $region20: #{tpu_custom_call.1} parent=1 // pred_region
      _
    $region21: #{tpu_custom_call.1} parent=1 // pred_fallthru
      _
    // Predicated region
    $region22: #{tpu_custom_call.1} parent=1 // pred_check
      _
    $region23: #{tpu_custom_call.1} parent=1 // pred_check_branch
      %25 = sbr.rel (0) target = $region25
    $region24: #{tpu_custom_call.1} parent=1 // pred_region
      _
    $region25: #{tpu_custom_call.1} parent=1 // pred_fallthru
      _
    // Predicated region
    $region26: #{tpu_custom_call.1} parent=1 // pred_check
      _
    $region27: #{tpu_custom_call.1} parent=1 // pred_check_branch
      %27 = sbr.rel (0) target = $region29
    $region28: #{tpu_custom_call.1} parent=1 // pred_region
      _
    $region29: #{tpu_custom_call.1} parent=1 // pred_fallthru
      _
    %v29 = vld [vmem:[%s0] sm:$0xff]
    %v30 = vld [vmem:[%s0 + $0x8] sm:$0xff]
    %v31 = vld [vmem:[%s0 + $0x10] sm:$0xff]
    %v32 = vld [vmem:[%s0 + $0x18] sm:$0xff]
    %v33 = vld [vmem:[%s0 + $0x20] sm:$0xff]
    %v34 = vld [vmem:[%s0 + $0x28] sm:$0xff]
    %v35 = vld [vmem:[%s0 + $0x30] sm:$0xff]
    %v36 = vld [vmem:[%s0 + $0x38] sm:$0xff]
    %v37 = vld [vmem:[%s0 + $0x40] sm:$0xff]
    %v38 = vld [vmem:[%s0 + $0x48] sm:$0xff]
    %v39 = vld [vmem:[%s0 + $0x50] sm:$0xff]
    %v40 = vld [vmem:[%s0 + $0x58] sm:$0xff]
    %v41 = vld [vmem:[%s0 + $0x60] sm:$0xff]
    %v42 = vld [vmem:[%s0 + $0x68] sm:$0xff]
    %v43 = vld [vmem:[%s0 + $0x70] sm:$0xff]
    %v44 = vld [vmem:[%s0 + $0x78] sm:$0xff]
    %v45 = vpack.c.bf16 %v30, %v29
    %v46 = vpack.c.bf16 %v32, %v31
    %v47 = vpack.c.bf16 %v34, %v33
    %v48 = vpack.c.bf16 %v36, %v35
    %v49 = vpack.c.bf16 %v38, %v37
    %v50 = vpack.c.bf16 %v40, %v39
    %v51 = vpack.c.bf16 %v42, %v41
    %v52 = vpack.c.bf16 %v44, %v43
    %v53 = vld [vmem:[%s1] sm:$0xf]
    %v54 = vld [vmem:[%s1 + $0x4] sm:$0xf]
    %v55 = vld [vmem:[%s1 + $0x8] sm:$0xf]
    %v56 = vld [vmem:[%s1 + $0xc] sm:$0xf]
    %v57 = vld [vmem:[%s1 + $0x10] sm:$0xf]
    %v58 = vld [vmem:[%s1 + $0x14] sm:$0xf]
    %v59 = vld [vmem:[%s1 + $0x18] sm:$0xf]
    %v60 = vld [vmem:[%s1 + $0x1c] sm:$0xf]
    %v61 = vld [vmem:[%s1 + $0x20] sm:$0xf]
    %v62 = vld [vmem:[%s1 + $0x24] sm:$0xf]
    %v63 = vld [vmem:[%s1 + $0x28] sm:$0xf]
    %v64 = vld [vmem:[%s1 + $0x2c] sm:$0xf]
    %v65 = vld [vmem:[%s1 + $0x30] sm:$0xf]
    %v66 = vld [vmem:[%s1 + $0x34] sm:$0xf]
    %v67 = vld [vmem:[%s1 + $0x38] sm:$0xf]
    %v68 = vld [vmem:[%s1 + $0x3c] sm:$0xf]
    %v69 = vld [vmem:[%s1 + $0x40] sm:$0xf]
    %v70 = vld [vmem:[%s1 + $0x44] sm:$0xf]
    %v71 = vld [vmem:[%s1 + $0x48] sm:$0xf]
    %v72 = vld [vmem:[%s1 + $0x4c] sm:$0xf]
    %v73 = vld [vmem:[%s1 + $0x50] sm:$0xf]
    %v74 = vld [vmem:[%s1 + $0x54] sm:$0xf]
    %v75 = vld [vmem:[%s1 + $0x58] sm:$0xf]
    %v76 = vld [vmem:[%s1 + $0x5c] sm:$0xf]
    %v77 = vld [vmem:[%s1 + $0x60] sm:$0xf]
    %v78 = vld [vmem:[%s1 + $0x64] sm:$0xf]
    %v79 = vld [vmem:[%s1 + $0x68] sm:$0xf]
    %v80 = vld [vmem:[%s1 + $0x6c] sm:$0xf]
    %v81 = vld [vmem:[%s1 + $0x70] sm:$0xf]
    %v82 = vld [vmem:[%s1 + $0x74] sm:$0xf]
    %v83 = vld [vmem:[%s1 + $0x78] sm:$0xf]
    %v84 = vld [vmem:[%s1 + $0x7c] sm:$0xf]
    %v85 = vld [vmem:[%s2] sm:$0xff]
    %v86 = vld [vmem:[%s2 + $0x8] sm:$0xff]
    %v87 = vld [vmem:[%s2 + $0x10] sm:$0xff]
    %v88 = vld [vmem:[%s2 + $0x18] sm:$0xff]
    %v89 = vld [vmem:[%s2 + $0x20] sm:$0xff]
    %v90 = vld [vmem:[%s2 + $0x28] sm:$0xff]
    %v91 = vld [vmem:[%s2 + $0x30] sm:$0xff]
    %v92 = vld [vmem:[%s2 + $0x38] sm:$0xff]
    %v93 = vld [vmem:[%s2 + $0x40] sm:$0xff]
    %v94 = vld [vmem:[%s2 + $0x48] sm:$0xff]
    %v95 = vld [vmem:[%s2 + $0x50] sm:$0xff]
    %v96 = vld [vmem:[%s2 + $0x58] sm:$0xff]
    %v97 = vld [vmem:[%s2 + $0x60] sm:$0xff]
    %v98 = vld [vmem:[%s2 + $0x68] sm:$0xff]
    %v99 = vld [vmem:[%s2 + $0x70] sm:$0xff]
    %v100 = vld [vmem:[%s2 + $0x78] sm:$0xff]
    %v101 = vld [vmem:[%s2 + $0x80] sm:$0xff]
    %v102 = vld [vmem:[%s2 + $0x88] sm:$0xff]
    %v103 = vld [vmem:[%s2 + $0x90] sm:$0xff]
    %v104 = vld [vmem:[%s2 + $0x98] sm:$0xff]
    %v105 = vld [vmem:[%s2 + $0xa0] sm:$0xff]
    %v106 = vld [vmem:[%s2 + $0xa8] sm:$0xff]
    %v107 = vld [vmem:[%s2 + $0xb0] sm:$0xff]
    %v108 = vld [vmem:[%s2 + $0xb8] sm:$0xff]
    %v109 = vld [vmem:[%s2 + $0xc0] sm:$0xff]
    %v110 = vld [vmem:[%s2 + $0xc8] sm:$0xff]
    %v111 = vld [vmem:[%s2 + $0xd0] sm:$0xff]
    %v112 = vld [vmem:[%s2 + $0xd8] sm:$0xff]
    %v113 = vld [vmem:[%s2 + $0xe0] sm:$0xff]
    %v114 = vld [vmem:[%s2 + $0xe8] sm:$0xff]
    %v115 = vld [vmem:[%s2 + $0xf0] sm:$0xff]
    %v116 = vld [vmem:[%s2 + $0xf8] sm:$0xff]
    %118 = vset.pattern.permute.xlu0 0
    %119 = vperm.xlu0 %118, %v85
    %v120 = vpop.permute.xlu0 %119
    %123 = vset.pattern.permute.xlu0 0
    %124 = vperm.xlu0 %123, %v86
    %v125 = vpop.permute.xlu0 %124
    %128 = vset.pattern.permute.xlu0 0
    %129 = vperm.xlu0 %128, %v87
    %v130 = vpop.permute.xlu0 %129
    %133 = vset.pattern.permute.xlu0 0
    %134 = vperm.xlu0 %133, %v88
    %v135 = vpop.permute.xlu0 %134
    %138 = vset.pattern.permute.xlu0 0
    %139 = vperm.xlu0 %138, %v89
    %v140 = vpop.permute.xlu0 %139
    %143 = vset.pattern.permute.xlu0 0
    %144 = vperm.xlu0 %143, %v90
    %v145 = vpop.permute.xlu0 %144
    %148 = vset.pattern.permute.xlu0 0
    %149 = vperm.xlu0 %148, %v91
    %v150 = vpop.permute.xlu0 %149
    %153 = vset.pattern.permute.xlu0 0
    %154 = vperm.xlu0 %153, %v92
    %v155 = vpop.permute.xlu0 %154
    %158 = vset.pattern.permute.xlu0 0
    %159 = vperm.xlu0 %158, %v93
    %v160 = vpop.permute.xlu0 %159
    %163 = vset.pattern.permute.xlu0 0
    %164 = vperm.xlu0 %163, %v94
    %v165 = vpop.permute.xlu0 %164
    %168 = vset.pattern.permute.xlu0 0
    %169 = vperm.xlu0 %168, %v95
    %v170 = vpop.permute.xlu0 %169
    %173 = vset.pattern.permute.xlu0 0
    %174 = vperm.xlu0 %173, %v96
    %v175 = vpop.permute.xlu0 %174
    %178 = vset.pattern.permute.xlu0 0
    %179 = vperm.xlu0 %178, %v97
    %v180 = vpop.permute.xlu0 %179
    %183 = vset.pattern.permute.xlu0 0
    %184 = vperm.xlu0 %183, %v98
    %v185 = vpop.permute.xlu0 %184
    %188 = vset.pattern.permute.xlu0 0
    %189 = vperm.xlu0 %188, %v99
    %v190 = vpop.permute.xlu0 %189
    %193 = vset.pattern.permute.xlu0 0
    %194 = vperm.xlu0 %193, %v100
    %v195 = vpop.permute.xlu0 %194
    %198 = vset.pattern.permute.xlu0 0
    %199 = vperm.xlu0 %198, %v101
    %v200 = vpop.permute.xlu0 %199
    %203 = vset.pattern.permute.xlu0 0
    %204 = vperm.xlu0 %203, %v102
    %v205 = vpop.permute.xlu0 %204
    %208 = vset.pattern.permute.xlu0 0
    %209 = vperm.xlu0 %208, %v103
    %v210 = vpop.permute.xlu0 %209
    %213 = vset.pattern.permute.xlu0 0
    %214 = vperm.xlu0 %213, %v104
    %v215 = vpop.permute.xlu0 %214
    %218 = vset.pattern.permute.xlu0 0
    %219 = vperm.xlu0 %218, %v105
    %v220 = vpop.permute.xlu0 %219
    %223 = vset.pattern.permute.xlu0 0
    %224 = vperm.xlu0 %223, %v106
    %v225 = vpop.permute.xlu0 %224
    %228 = vset.pattern.permute.xlu0 0
    %229 = vperm.xlu0 %228, %v107
    %v230 = vpop.permute.xlu0 %229
    %233 = vset.pattern.permute.xlu0 0
    %234 = vperm.xlu0 %233, %v108
    %v235 = vpop.permute.xlu0 %234
    %238 = vset.pattern.permute.xlu0 0
    %239 = vperm.xlu0 %238, %v109
    %v240 = vpop.permute.xlu0 %239
    %243 = vset.pattern.permute.xlu0 0
    %244 = vperm.xlu0 %243, %v110
    %v245 = vpop.permute.xlu0 %244
    %248 = vset.pattern.permute.xlu0 0
    %249 = vperm.xlu0 %248, %v111
    %v250 = vpop.permute.xlu0 %249
    %253 = vset.pattern.permute.xlu0 0
    %254 = vperm.xlu0 %253, %v112
    %v255 = vpop.permute.xlu0 %254
    %258 = vset.pattern.permute.xlu0 0
    %259 = vperm.xlu0 %258, %v113
    %v260 = vpop.permute.xlu0 %259
    %263 = vset.pattern.permute.xlu0 0
    %264 = vperm.xlu0 %263, %v114
    %v265 = vpop.permute.xlu0 %264
    %268 = vset.pattern.permute.xlu0 0
    %269 = vperm.xlu0 %268, %v115
    %v270 = vpop.permute.xlu0 %269
    %273 = vset.pattern.permute.xlu0 0
    %274 = vperm.xlu0 %273, %v116
    %v275 = vpop.permute.xlu0 %274
    %v309 = vunpack.c.l.b16 %v53
    %v310 = vunpack.c.l.b16 %v54
    %v311 = vunpack.c.l.b16 %v55
    %v312 = vunpack.c.l.b16 %v56
    %v313 = vunpack.c.l.b16 %v57
    %v314 = vunpack.c.l.b16 %v58
    %v315 = vunpack.c.l.b16 %v59
    %v316 = vunpack.c.l.b16 %v60
    %v317 = vunpack.c.l.b16 %v61
    %v318 = vunpack.c.l.b16 %v62
    %v319 = vunpack.c.l.b16 %v63
    %v320 = vunpack.c.l.b16 %v64
    %v321 = vunpack.c.l.b16 %v65
    %v322 = vunpack.c.l.b16 %v66
    %v323 = vunpack.c.l.b16 %v67
    %v324 = vunpack.c.l.b16 %v68
    %v325 = vunpack.c.l.b16 %v69
    %v326 = vunpack.c.l.b16 %v70
    %v327 = vunpack.c.l.b16 %v71
    %v328 = vunpack.c.l.b16 %v72
    %v329 = vunpack.c.l.b16 %v73
    %v330 = vunpack.c.l.b16 %v74
    %v331 = vunpack.c.l.b16 %v75
    %v332 = vunpack.c.l.b16 %v76
    %v333 = vunpack.c.l.b16 %v77
    %v334 = vunpack.c.l.b16 %v78
    %v335 = vunpack.c.l.b16 %v79
    %v336 = vunpack.c.l.b16 %v80
    %v337 = vunpack.c.l.b16 %v81
    %v338 = vunpack.c.l.b16 %v82
    %v339 = vunpack.c.l.b16 %v83
    %v340 = vunpack.c.l.b16 %v84
    %v341 = vpack.c.b16 %v310, %v309
    %v342 = vpack.c.b16 %v312, %v311
    %v343 = vpack.c.b16 %v314, %v313
    %v344 = vpack.c.b16 %v316, %v315
    %v345 = vpack.c.b16 %v318, %v317
    %v346 = vpack.c.b16 %v320, %v319
    %v347 = vpack.c.b16 %v322, %v321
    %v348 = vpack.c.b16 %v324, %v323
    %v349 = vpack.c.b16 %v326, %v325
    %v350 = vpack.c.b16 %v328, %v327
    %v351 = vpack.c.b16 %v330, %v329
    %v352 = vpack.c.b16 %v332, %v331
    %v353 = vpack.c.b16 %v334, %v333
    %v354 = vpack.c.b16 %v336, %v335
    %v355 = vpack.c.b16 %v338, %v337
    %v356 = vpack.c.b16 %v340, %v339
    %vm357 = vcmask 261120
    %v359 = vsel %vm357, %v341, 0
    %v362 = vsel %vm357, %v342, 0
    %v365 = vsel %vm357, %v343, 0
    %v368 = vsel %vm357, %v344, 0
    %v371 = vsel %vm357, %v345, 0
    %v374 = vsel %vm357, %v346, 0
    %v377 = vsel %vm357, %v347, 0
    %v380 = vsel %vm357, %v348, 0
    %v383 = vsel %vm357, %v349, 0
    %v386 = vsel %vm357, %v350, 0
    %v389 = vsel %vm357, %v351, 0
    %v392 = vsel %vm357, %v352, 0
    %v395 = vsel %vm357, %v353, 0
    %v398 = vsel %vm357, %v354, 0
    %v401 = vsel %vm357, %v355, 0
    %v404 = vsel %vm357, %v356, 0
    %v407 = vsel %vm357, %v45, 0
    %v410 = vsel %vm357, %v46, 0
    %v413 = vsel %vm357, %v47, 0
    %v416 = vsel %vm357, %v48, 0
    %v419 = vsel %vm357, %v49, 0
    %v422 = vsel %vm357, %v50, 0
    %v425 = vsel %vm357, %v51, 0
    %v428 = vsel %vm357, %v52, 0
    %430 = vmatprep.subr.bf16.mxu0 0
    %431 = vmatpush1.bf16.xpose.msra.mxu0 %v428
    %432 = vmatprep.subr.bf16.mxu0 0
    %433 = vmatpush1.bf16.xpose.msra.mxu0 %v425
    %434 = vmatprep.subr.bf16.mxu0 0
    %435 = vmatpush1.bf16.xpose.msra.mxu0 %v422
    %436 = vmatprep.subr.bf16.mxu0 0
    %437 = vmatpush1.bf16.xpose.msra.mxu0 %v419
    %438 = vmatprep.subr.bf16.mxu0 0
    %439 = vmatpush1.bf16.xpose.msra.mxu0 %v416
    %440 = vmatprep.subr.bf16.mxu0 0
    %441 = vmatpush1.bf16.xpose.msra.mxu0 %v413
    %442 = vmatprep.subr.bf16.mxu0 0
    %443 = vmatpush1.bf16.xpose.msra.mxu0 %v410
    %444 = vmatprep.subr.bf16.mxu0 0
    %445 = vmatpush1.bf16.xpose.msra.mxu0 %v407
    %446 = vmatprep.subr.bf16.mxu0 0
    %447 = vmatpush2.bf16.xpose.msra.mxu0 0
    %448 = vmatprep.subr.bf16.mxu0 0
    %449 = vmatpush2.bf16.xpose.msra.mxu0 0
    %450 = vmatprep.subr.bf16.mxu0 0
    %451 = vmatpush2.bf16.xpose.msra.mxu0 0
    %452 = vmatprep.subr.bf16.mxu0 0
    %453 = vmatpush2.bf16.xpose.msra.mxu0 0
    %454 = vmatprep.subr.bf16.mxu0 0
    %455 = vmatpush2.bf16.xpose.msra.mxu0 0
    %456 = vmatprep.subr.bf16.mxu0 0
    %457 = vmatpush2.bf16.xpose.msra.mxu0 0
    %458 = vmatprep.subr.bf16.mxu0 0
    %459 = vmatpush2.bf16.xpose.msra.mxu0 0
    %460 = vmatprep.subr.bf16.mxu0 0
    %461 = vmatpush2.bf16.xpose.msra.mxu0 0
    %462 = vmatprep.mubr.bf16.mxu0 0
    %463 = vmatmul.mubr.bf16.gmra.mxu0 %v359
    %v464 = vpop.f32.mrf.mxu0
    %v465 = vadd.f32 %v120, %v464
    %v466 = vpop.f32.mrf.mxu0
    %v467 = vpop.f32.mrf.mxu0
    %v468 = vadd.f32 %v125, %v467
    %v469 = vpop.f32.mrf.mxu0
    %470 = vmatprep.mubr.bf16.mxu0 0
    %471 = vmatmul.mubr.bf16.gmra.mxu0 %v362
    %v472 = vpop.f32.mrf.mxu0
    %v473 = vadd.f32 %v130, %v472
    %v474 = vpop.f32.mrf.mxu0
    %v475 = vpop.f32.mrf.mxu0
    %v476 = vadd.f32 %v135, %v475
    %v477 = vpop.f32.mrf.mxu0
    %478 = vmatprep.mubr.bf16.mxu0 0
    %479 = vmatmul.mubr.bf16.gmra.mxu0 %v365
    %v480 = vpop.f32.mrf.mxu0
    %v481 = vadd.f32 %v140, %v480
    %v482 = vpop.f32.mrf.mxu0
    %v483 = vpop.f32.mrf.mxu0
    %v484 = vadd.f32 %v145, %v483
    %v485 = vpop.f32.mrf.mxu0
    %486 = vmatprep.mubr.bf16.mxu0 0
    %487 = vmatmul.mubr.bf16.gmra.mxu0 %v368
    %v488 = vpop.f32.mrf.mxu0
    %v489 = vadd.f32 %v150, %v488
    %v490 = vpop.f32.mrf.mxu0
    %v491 = vpop.f32.mrf.mxu0
    %v492 = vadd.f32 %v155, %v491
    %v493 = vpop.f32.mrf.mxu0
    %494 = vmatprep.mubr.bf16.mxu0 0
    %495 = vmatmul.mubr.bf16.gmra.mxu0 %v371
    %v496 = vpop.f32.mrf.mxu0
    %v497 = vadd.f32 %v160, %v496
    %v498 = vpop.f32.mrf.mxu0
    %v499 = vpop.f32.mrf.mxu0
    %v500 = vadd.f32 %v165, %v499
    %v501 = vpop.f32.mrf.mxu0
    %502 = vmatprep.mubr.bf16.mxu0 0
    %503 = vmatmul.mubr.bf16.gmra.mxu0 %v374
    %v504 = vpop.f32.mrf.mxu0
    %v505 = vadd.f32 %v170, %v504
    %v506 = vpop.f32.mrf.mxu0
    %v507 = vpop.f32.mrf.mxu0
    %v508 = vadd.f32 %v175, %v507
    %v509 = vpop.f32.mrf.mxu0
    %510 = vmatprep.mubr.bf16.mxu0 0
    %511 = vmatmul.mubr.bf16.gmra.mxu0 %v377
    %v512 = vpop.f32.mrf.mxu0
    %v513 = vadd.f32 %v180, %v512
    %v514 = vpop.f32.mrf.mxu0
    %v515 = vpop.f32.mrf.mxu0
    %v516 = vadd.f32 %v185, %v515
    %v517 = vpop.f32.mrf.mxu0
    %518 = vmatprep.mubr.bf16.mxu0 0
    %519 = vmatmul.mubr.bf16.gmra.mxu0 %v380
    %v520 = vpop.f32.mrf.mxu0
    %v521 = vadd.f32 %v190, %v520
    %v522 = vpop.f32.mrf.mxu0
    %v523 = vpop.f32.mrf.mxu0
    %v524 = vadd.f32 %v195, %v523
    %v525 = vpop.f32.mrf.mxu0
    %526 = vmatprep.mubr.bf16.mxu0 0
    %527 = vmatmul.mubr.bf16.gmra.mxu0 %v383
    %v528 = vpop.f32.mrf.mxu0
    %v529 = vadd.f32 %v200, %v528
    %v530 = vpop.f32.mrf.mxu0
    %v531 = vpop.f32.mrf.mxu0
    %v532 = vadd.f32 %v205, %v531
    %v533 = vpop.f32.mrf.mxu0
    %534 = vmatprep.mubr.bf16.mxu0 0
    %535 = vmatmul.mubr.bf16.gmra.mxu0 %v386
    %v536 = vpop.f32.mrf.mxu0
    %v537 = vadd.f32 %v210, %v536
    %v538 = vpop.f32.mrf.mxu0
    %v539 = vpop.f32.mrf.mxu0
    %v540 = vadd.f32 %v215, %v539
    %v541 = vpop.f32.mrf.mxu0
    %542 = vmatprep.mubr.bf16.mxu0 0
    %543 = vmatmul.mubr.bf16.gmra.mxu0 %v389
    %v544 = vpop.f32.mrf.mxu0
    %v545 = vadd.f32 %v220, %v544
    %v546 = vpop.f32.mrf.mxu0
    %v547 = vpop.f32.mrf.mxu0
    %v548 = vadd.f32 %v225, %v547
    %v549 = vpop.f32.mrf.mxu0
    %550 = vmatprep.mubr.bf16.mxu0 0
    %551 = vmatmul.mubr.bf16.gmra.mxu0 %v392
    %v552 = vpop.f32.mrf.mxu0
    %v553 = vadd.f32 %v230, %v552
    %v554 = vpop.f32.mrf.mxu0
    %v555 = vpop.f32.mrf.mxu0
    %v556 = vadd.f32 %v235, %v555
    %v557 = vpop.f32.mrf.mxu0
    %558 = vmatprep.mubr.bf16.mxu0 0
    %559 = vmatmul.mubr.bf16.gmra.mxu0 %v395
    %v560 = vpop.f32.mrf.mxu0
    %v561 = vadd.f32 %v240, %v560
    %v562 = vpop.f32.mrf.mxu0
    %v563 = vpop.f32.mrf.mxu0
    %v564 = vadd.f32 %v245, %v563
    %v565 = vpop.f32.mrf.mxu0
    %566 = vmatprep.mubr.bf16.mxu0 0
    %567 = vmatmul.mubr.bf16.gmra.mxu0 %v398
    %v568 = vpop.f32.mrf.mxu0
    %v569 = vadd.f32 %v250, %v568
    %v570 = vpop.f32.mrf.mxu0
    %v571 = vpop.f32.mrf.mxu0
    %v572 = vadd.f32 %v255, %v571
    %v573 = vpop.f32.mrf.mxu0
    %574 = vmatprep.mubr.bf16.mxu0 0
    %575 = vmatmul.mubr.bf16.gmra.mxu0 %v401
    %v576 = vpop.f32.mrf.mxu0
    %v577 = vadd.f32 %v260, %v576
    %v578 = vpop.f32.mrf.mxu0
    %v579 = vpop.f32.mrf.mxu0
    %v580 = vadd.f32 %v265, %v579
    %v581 = vpop.f32.mrf.mxu0
    %582 = vmatprep.mubr.bf16.mxu0 0
    %583 = vmatmul.mubr.bf16.gmra.mxu0 %v404
    %v584 = vpop.f32.mrf.mxu0
    %v585 = vadd.f32 %v270, %v584
    %v586 = vpop.f32.mrf.mxu0
    %v587 = vpop.f32.mrf.mxu0
    %v588 = vadd.f32 %v275, %v587
    %v589 = vpop.f32.mrf.mxu0
    %590 = vdwg.mxu0
    %v591 = vmax.f32 %v465, 0.0
    %v592 = vmax.f32 %v468, 0.0
    %v593 = vmax.f32 %v473, 0.0
    %v594 = vmax.f32 %v476, 0.0
    %v595 = vmax.f32 %v481, 0.0
    %v596 = vmax.f32 %v484, 0.0
    %v597 = vmax.f32 %v489, 0.0
    %v598 = vmax.f32 %v492, 0.0
    %v599 = vmax.f32 %v497, 0.0
    %v600 = vmax.f32 %v500, 0.0
    %v601 = vmax.f32 %v505, 0.0
    %v602 = vmax.f32 %v508, 0.0
    %v603 = vmax.f32 %v513, 0.0
    %v604 = vmax.f32 %v516, 0.0
    %v605 = vmax.f32 %v521, 0.0
    %v606 = vmax.f32 %v524, 0.0
    %v607 = vmax.f32 %v529, 0.0
    %v608 = vmax.f32 %v532, 0.0
    %v609 = vmax.f32 %v537, 0.0
    %v610 = vmax.f32 %v540, 0.0
    %v611 = vmax.f32 %v545, 0.0
    %v612 = vmax.f32 %v548, 0.0
    %v613 = vmax.f32 %v553, 0.0
    %v614 = vmax.f32 %v556, 0.0
    %v615 = vmax.f32 %v561, 0.0
    %v616 = vmax.f32 %v564, 0.0
    %v617 = vmax.f32 %v569, 0.0
    %v618 = vmax.f32 %v572, 0.0
    %v619 = vmax.f32 %v577, 0.0
    %v620 = vmax.f32 %v580, 0.0
    %v621 = vmax.f32 %v585, 0.0
    %v622 = vmax.f32 %v588, 0.0
    %v623 = vpack.c.bf16 %v592, %v591
    %v624 = vpack.c.bf16 %v594, %v593
    %v625 = vpack.c.bf16 %v596, %v595
    %v626 = vpack.c.bf16 %v598, %v597
    %v627 = vpack.c.bf16 %v600, %v599
    %v628 = vpack.c.bf16 %v602, %v601
    %v629 = vpack.c.bf16 %v604, %v603
    %v630 = vpack.c.bf16 %v606, %v605
    %v631 = vpack.c.bf16 %v608, %v607
    %v632 = vpack.c.bf16 %v610, %v609
    %v633 = vpack.c.bf16 %v612, %v611
    %v634 = vpack.c.bf16 %v614, %v613
    %v635 = vpack.c.bf16 %v616, %v615
    %v636 = vpack.c.bf16 %v618, %v617
    %v637 = vpack.c.bf16 %v620, %v619
    %v638 = vpack.c.bf16 %v622, %v621
    %v639 = vld [vmem:[%s3] sm:$0xff]
    %v640 = vld [vmem:[%s3 + $0x8] sm:$0xff]
    %v641 = vld [vmem:[%s3 + $0x10] sm:$0xff]
    %v642 = vld [vmem:[%s3 + $0x18] sm:$0xff]
    %v643 = vld [vmem:[%s3 + $0x20] sm:$0xff]
    %v644 = vld [vmem:[%s3 + $0x28] sm:$0xff]
    %v645 = vld [vmem:[%s3 + $0x30] sm:$0xff]
    %v646 = vld [vmem:[%s3 + $0x38] sm:$0xff]
    %v647 = vld [vmem:[%s3 + $0x40] sm:$0xff]
    %v648 = vld [vmem:[%s3 + $0x48] sm:$0xff]
    %v649 = vld [vmem:[%s3 + $0x50] sm:$0xff]
    %v650 = vld [vmem:[%s3 + $0x58] sm:$0xff]
    %v651 = vld [vmem:[%s3 + $0x60] sm:$0xff]
    %v652 = vld [vmem:[%s3 + $0x68] sm:$0xff]
    %v653 = vld [vmem:[%s3 + $0x70] sm:$0xff]
    %v654 = vld [vmem:[%s3 + $0x78] sm:$0xff]
    %v655 = vld [vmem:[%s4] sm:$0xff]
    %v656 = vld [vmem:[%s4 + $0x8] sm:$0xff]
    %v657 = vld [vmem:[%s4 + $0x10] sm:$0xff]
    %v658 = vld [vmem:[%s4 + $0x18] sm:$0xff]
    %v659 = vld [vmem:[%s4 + $0x20] sm:$0xff]
    %v660 = vld [vmem:[%s4 + $0x28] sm:$0xff]
    %v661 = vld [vmem:[%s4 + $0x30] sm:$0xff]
    %v662 = vld [vmem:[%s4 + $0x38] sm:$0xff]
    %v663 = vld [vmem:[%s4 + $0x40] sm:$0xff]
    %v664 = vld [vmem:[%s4 + $0x48] sm:$0xff]
    %v665 = vld [vmem:[%s4 + $0x50] sm:$0xff]
    %v666 = vld [vmem:[%s4 + $0x58] sm:$0xff]
    %v667 = vld [vmem:[%s4 + $0x60] sm:$0xff]
    %v668 = vld [vmem:[%s4 + $0x68] sm:$0xff]
    %v669 = vld [vmem:[%s4 + $0x70] sm:$0xff]
    %v670 = vld [vmem:[%s4 + $0x78] sm:$0xff]
    %672 = vset.pattern.permute.xlu0 0
    %673 = vperm.xlu0 %672, %v655
    %v674 = vpop.permute.xlu0 %673
    %677 = vset.pattern.permute.xlu0 0
    %678 = vperm.xlu0 %677, %v656
    %v679 = vpop.permute.xlu0 %678
    %682 = vset.pattern.permute.xlu0 0
    %683 = vperm.xlu0 %682, %v657
    %v684 = vpop.permute.xlu0 %683
    %687 = vset.pattern.permute.xlu0 0
    %688 = vperm.xlu0 %687, %v658
    %v689 = vpop.permute.xlu0 %688
    %692 = vset.pattern.permute.xlu0 0
    %693 = vperm.xlu0 %692, %v659
    %v694 = vpop.permute.xlu0 %693
    %697 = vset.pattern.permute.xlu0 0
    %698 = vperm.xlu0 %697, %v660
    %v699 = vpop.permute.xlu0 %698
    %702 = vset.pattern.permute.xlu0 0
    %703 = vperm.xlu0 %702, %v661
    %v704 = vpop.permute.xlu0 %703
    %707 = vset.pattern.permute.xlu0 0
    %708 = vperm.xlu0 %707, %v662
    %v709 = vpop.permute.xlu0 %708
    %712 = vset.pattern.permute.xlu0 0
    %713 = vperm.xlu0 %712, %v663
    %v714 = vpop.permute.xlu0 %713
    %717 = vset.pattern.permute.xlu0 0
    %718 = vperm.xlu0 %717, %v664
    %v719 = vpop.permute.xlu0 %718
    %722 = vset.pattern.permute.xlu0 0
    %723 = vperm.xlu0 %722, %v665
    %v724 = vpop.permute.xlu0 %723
    %727 = vset.pattern.permute.xlu0 0
    %728 = vperm.xlu0 %727, %v666
    %v729 = vpop.permute.xlu0 %728
    %732 = vset.pattern.permute.xlu0 0
    %733 = vperm.xlu0 %732, %v667
    %v734 = vpop.permute.xlu0 %733
    %737 = vset.pattern.permute.xlu0 0
    %738 = vperm.xlu0 %737, %v668
    %v739 = vpop.permute.xlu0 %738
    %742 = vset.pattern.permute.xlu0 0
    %743 = vperm.xlu0 %742, %v669
    %v744 = vpop.permute.xlu0 %743
    %747 = vset.pattern.permute.xlu0 0
    %748 = vperm.xlu0 %747, %v670
    %v749 = vpop.permute.xlu0 %748
    %v767 = vunpack.c.l.b16 %v639
    %v768 = vunpack.c.h.b16 %v639
    %v769 = vunpack.c.l.b16 %v640
    %v770 = vunpack.c.h.b16 %v640
    %v771 = vunpack.c.l.b16 %v641
    %v772 = vunpack.c.h.b16 %v641
    %v773 = vunpack.c.l.b16 %v642
    %v774 = vunpack.c.h.b16 %v642
    %v775 = vunpack.c.l.b16 %v643
    %v776 = vunpack.c.h.b16 %v643
    %v777 = vunpack.c.l.b16 %v644
    %v778 = vunpack.c.h.b16 %v644
    %v779 = vunpack.c.l.b16 %v645
    %v780 = vunpack.c.h.b16 %v645
    %v781 = vunpack.c.l.b16 %v646
    %v782 = vunpack.c.h.b16 %v646
    %v783 = vunpack.c.l.b16 %v647
    %v784 = vunpack.c.h.b16 %v647
    %v785 = vunpack.c.l.b16 %v648
    %v786 = vunpack.c.h.b16 %v648
    %v787 = vunpack.c.l.b16 %v649
    %v788 = vunpack.c.h.b16 %v649
    %v789 = vunpack.c.l.b16 %v650
    %v790 = vunpack.c.h.b16 %v650
    %v791 = vunpack.c.l.b16 %v651
    %v792 = vunpack.c.h.b16 %v651
    %v793 = vunpack.c.l.b16 %v652
    %v794 = vunpack.c.h.b16 %v652
    %v795 = vunpack.c.l.b16 %v653
    %v796 = vunpack.c.h.b16 %v653
    %v797 = vunpack.c.l.b16 %v654
    %v798 = vunpack.c.h.b16 %v654
    %v799 = vpack.c.b16 %v769, %v767
    %v800 = vpack.c.b16 %v770, %v768
    %v801 = vpack.c.b16 %v773, %v771
    %v802 = vpack.c.b16 %v774, %v772
    %v803 = vpack.c.b16 %v777, %v775
    %v804 = vpack.c.b16 %v778, %v776
    %v805 = vpack.c.b16 %v781, %v779
    %v806 = vpack.c.b16 %v782, %v780
    %v807 = vpack.c.b16 %v785, %v783
    %v808 = vpack.c.b16 %v786, %v784
    %v809 = vpack.c.b16 %v789, %v787
    %v810 = vpack.c.b16 %v790, %v788
    %v811 = vpack.c.b16 %v793, %v791
    %v812 = vpack.c.b16 %v794, %v792
    %v813 = vpack.c.b16 %v797, %v795
    %v814 = vpack.c.b16 %v798, %v796
    %831 = vmatprep.subr.bf16.mxu0 0
    %832 = vmatpush1.bf16.msra.mxu0 %v630
    %833 = vmatprep.subr.bf16.mxu0 0
    %834 = vmatpush1.bf16.msra.mxu0 %v629
    %835 = vmatprep.subr.bf16.mxu0 0
    %836 = vmatpush1.bf16.msra.mxu0 %v628
    %837 = vmatprep.subr.bf16.mxu0 0
    %838 = vmatpush1.bf16.msra.mxu0 %v627
    %839 = vmatprep.subr.bf16.mxu0 0
    %840 = vmatpush1.bf16.msra.mxu0 %v626
    %841 = vmatprep.subr.bf16.mxu0 0
    %842 = vmatpush1.bf16.msra.mxu0 %v625
    %843 = vmatprep.subr.bf16.mxu0 0
    %844 = vmatpush1.bf16.msra.mxu0 %v624
    %845 = vmatprep.subr.bf16.mxu0 0
    %846 = vmatpush1.bf16.msra.mxu0 %v623
    %847 = vmatprep.subr.bf16.mxu0 0
    %848 = vmatpush2.bf16.msra.mxu0 %v638
    %849 = vmatprep.subr.bf16.mxu0 0
    %850 = vmatpush2.bf16.msra.mxu0 %v637
    %851 = vmatprep.subr.bf16.mxu0 0
    %852 = vmatpush2.bf16.msra.mxu0 %v636
    %853 = vmatprep.subr.bf16.mxu0 0
    %854 = vmatpush2.bf16.msra.mxu0 %v635
    %855 = vmatprep.subr.bf16.mxu0 0
    %856 = vmatpush2.bf16.msra.mxu0 %v634
    %857 = vmatprep.subr.bf16.mxu0 0
    %858 = vmatpush2.bf16.msra.mxu0 %v633
    %859 = vmatprep.subr.bf16.mxu0 0
    %860 = vmatpush2.bf16.msra.mxu0 %v632
    %861 = vmatprep.subr.bf16.mxu0 0
    %862 = vmatpush2.bf16.msra.mxu0 %v631
    %863 = vmatprep.mubr.bf16.mxu0 %v800
    %864 = vmatmul.mubr.bf16.gmra.mxu0 %v799
    %v865 = vpop.f32.mrf.mxu0
    %v866 = vadd.f32 %v674, %v865
    %v867 = vpop.f32.mrf.mxu0
    %v868 = vpop.f32.mrf.mxu0
    %v869 = vadd.f32 %v679, %v868
    %v870 = vpop.f32.mrf.mxu0
    %871 = vmatprep.mubr.bf16.mxu0 %v802
    %872 = vmatmul.mubr.bf16.gmra.mxu0 %v801
    %v873 = vpop.f32.mrf.mxu0
    %v874 = vadd.f32 %v684, %v873
    %v875 = vpop.f32.mrf.mxu0
    %v876 = vpop.f32.mrf.mxu0
    %v877 = vadd.f32 %v689, %v876
    %v878 = vpop.f32.mrf.mxu0
    %879 = vmatprep.mubr.bf16.mxu0 %v804
    %880 = vmatmul.mubr.bf16.gmra.mxu0 %v803
    %v881 = vpop.f32.mrf.mxu0
    %v882 = vadd.f32 %v694, %v881
    %v883 = vpop.f32.mrf.mxu0
    %v884 = vpop.f32.mrf.mxu0
    %v885 = vadd.f32 %v699, %v884
    %v886 = vpop.f32.mrf.mxu0
    %887 = vmatprep.mubr.bf16.mxu0 %v806
    %888 = vmatmul.mubr.bf16.gmra.mxu0 %v805
    %v889 = vpop.f32.mrf.mxu0
    %v890 = vadd.f32 %v704, %v889
    %v891 = vpop.f32.mrf.mxu0
    %v892 = vpop.f32.mrf.mxu0
    %v893 = vadd.f32 %v709, %v892
    %v894 = vpop.f32.mrf.mxu0
    %895 = vmatprep.mubr.bf16.mxu0 %v808
    %896 = vmatmul.mubr.bf16.gmra.mxu0 %v807
    %v897 = vpop.f32.mrf.mxu0
    %v898 = vadd.f32 %v714, %v897
    %v899 = vpop.f32.mrf.mxu0
    %v900 = vpop.f32.mrf.mxu0
    %v901 = vadd.f32 %v719, %v900
    %v902 = vpop.f32.mrf.mxu0
    %903 = vmatprep.mubr.bf16.mxu0 %v810
    %904 = vmatmul.mubr.bf16.gmra.mxu0 %v809
    %v905 = vpop.f32.mrf.mxu0
    %v906 = vadd.f32 %v724, %v905
    %v907 = vpop.f32.mrf.mxu0
    %v908 = vpop.f32.mrf.mxu0
    %v909 = vadd.f32 %v729, %v908
    %v910 = vpop.f32.mrf.mxu0
    %911 = vmatprep.mubr.bf16.mxu0 %v812
    %912 = vmatmul.mubr.bf16.gmra.mxu0 %v811
    %v913 = vpop.f32.mrf.mxu0
    %v914 = vadd.f32 %v734, %v913
    %v915 = vpop.f32.mrf.mxu0
    %v916 = vpop.f32.mrf.mxu0
    %v917 = vadd.f32 %v739, %v916
    %v918 = vpop.f32.mrf.mxu0
    %919 = vmatprep.mubr.bf16.mxu0 %v814
    %920 = vmatmul.mubr.bf16.gmra.mxu0 %v813
    %v921 = vpop.f32.mrf.mxu0
    %v922 = vadd.f32 %v744, %v921
    %v923 = vpop.f32.mrf.mxu0
    %v924 = vpop.f32.mrf.mxu0
    %v925 = vadd.f32 %v749, %v924
    %v926 = vpop.f32.mrf.mxu0
    %927 = vdwg.mxu0
    %v928 = vmax.f32 %v866, 0.0
    %v929 = vmax.f32 %v869, 0.0
    %v930 = vmax.f32 %v874, 0.0
    %v931 = vmax.f32 %v877, 0.0
    %v932 = vmax.f32 %v882, 0.0
    %v933 = vmax.f32 %v885, 0.0
    %v934 = vmax.f32 %v890, 0.0
    %v935 = vmax.f32 %v893, 0.0
    %v936 = vmax.f32 %v898, 0.0
    %v937 = vmax.f32 %v901, 0.0
    %v938 = vmax.f32 %v906, 0.0
    %v939 = vmax.f32 %v909, 0.0
    %v940 = vmax.f32 %v914, 0.0
    %v941 = vmax.f32 %v917, 0.0
    %v942 = vmax.f32 %v922, 0.0
    %v943 = vmax.f32 %v925, 0.0
    %v944 = vld [vmem:[%s5] sm:$0xff]
    %v945 = vld [vmem:[%s5 + $0x8] sm:$0xff]
    %v946 = vld [vmem:[%s5 + $0x10] sm:$0xff]
    %v947 = vld [vmem:[%s5 + $0x18] sm:$0xff]
    %v948 = vld [vmem:[%s5 + $0x20] sm:$0xff]
    %v949 = vld [vmem:[%s5 + $0x28] sm:$0xff]
    %v950 = vld [vmem:[%s5 + $0x30] sm:$0xff]
    %v951 = vld [vmem:[%s5 + $0x38] sm:$0xff]
    %v952 = vld [vmem:[%s5 + $0x40] sm:$0xff]
    %v953 = vld [vmem:[%s5 + $0x48] sm:$0xff]
    %v954 = vld [vmem:[%s5 + $0x50] sm:$0xff]
    %v955 = vld [vmem:[%s5 + $0x58] sm:$0xff]
    %v956 = vld [vmem:[%s5 + $0x60] sm:$0xff]
    %v957 = vld [vmem:[%s5 + $0x68] sm:$0xff]
    %v958 = vld [vmem:[%s5 + $0x70] sm:$0xff]
    %v959 = vld [vmem:[%s5 + $0x78] sm:$0xff]
    %961 = vset.pattern.permute.xlu0 0
    %962 = vperm.xlu0 %961, %v944
    %v963 = vpop.permute.xlu0 %962
    %966 = vset.pattern.permute.xlu0 0
    %967 = vperm.xlu0 %966, %v945
    %v968 = vpop.permute.xlu0 %967
    %971 = vset.pattern.permute.xlu0 0
    %972 = vperm.xlu0 %971, %v946
    %v973 = vpop.permute.xlu0 %972
    %976 = vset.pattern.permute.xlu0 0
    %977 = vperm.xlu0 %976, %v947
    %v978 = vpop.permute.xlu0 %977
    %981 = vset.pattern.permute.xlu0 0
    %982 = vperm.xlu0 %981, %v948
    %v983 = vpop.permute.xlu0 %982
    %986 = vset.pattern.permute.xlu0 0
    %987 = vperm.xlu0 %986, %v949
    %v988 = vpop.permute.xlu0 %987
    %991 = vset.pattern.permute.xlu0 0
    %992 = vperm.xlu0 %991, %v950
    %v993 = vpop.permute.xlu0 %992
    %996 = vset.pattern.permute.xlu0 0
    %997 = vperm.xlu0 %996, %v951
    %v998 = vpop.permute.xlu0 %997
    %1001 = vset.pattern.permute.xlu0 0
    %1002 = vperm.xlu0 %1001, %v952
    %v1003 = vpop.permute.xlu0 %1002
    %1006 = vset.pattern.permute.xlu0 0
    %1007 = vperm.xlu0 %1006, %v953
    %v1008 = vpop.permute.xlu0 %1007
    %1011 = vset.pattern.permute.xlu0 0
    %1012 = vperm.xlu0 %1011, %v954
    %v1013 = vpop.permute.xlu0 %1012
    %1016 = vset.pattern.permute.xlu0 0
    %1017 = vperm.xlu0 %1016, %v955
    %v1018 = vpop.permute.xlu0 %1017
    %1021 = vset.pattern.permute.xlu0 0
    %1022 = vperm.xlu0 %1021, %v956
    %v1023 = vpop.permute.xlu0 %1022
    %1026 = vset.pattern.permute.xlu0 0
    %1027 = vperm.xlu0 %1026, %v957
    %v1028 = vpop.permute.xlu0 %1027
    %1031 = vset.pattern.permute.xlu0 0
    %1032 = vperm.xlu0 %1031, %v958
    %v1033 = vpop.permute.xlu0 %1032
    %1036 = vset.pattern.permute.xlu0 0
    %1037 = vperm.xlu0 %1036, %v959
    %v1038 = vpop.permute.xlu0 %1037
    %v1040 = vmul.f32 %v928, %v963
    %v1041 = vmul.f32 %v929, %v968
    %v1042 = vmul.f32 %v930, %v973
    %v1043 = vmul.f32 %v931, %v978
    %v1044 = vmul.f32 %v932, %v983
    %v1045 = vmul.f32 %v933, %v988
    %v1046 = vmul.f32 %v934, %v993
    %v1047 = vmul.f32 %v935, %v998
    %v1048 = vmul.f32 %v936, %v1003
    %v1049 = vmul.f32 %v937, %v1008
    %v1050 = vmul.f32 %v938, %v1013
    %v1051 = vmul.f32 %v939, %v1018
    %v1052 = vmul.f32 %v940, %v1023
    %v1053 = vmul.f32 %v941, %v1028
    %v1054 = vmul.f32 %v942, %v1033
    %v1055 = vmul.f32 %v943, %v1038
    %v1056 = vadd.f32 %v1040, %v1041
    %v1057 = vadd.f32 %v1056, %v1042
    %v1058 = vadd.f32 %v1057, %v1043
    %v1059 = vadd.f32 %v1058, %v1044
    %v1060 = vadd.f32 %v1059, %v1045
    %v1061 = vadd.f32 %v1060, %v1046
    %v1062 = vadd.f32 %v1061, %v1047
    %v1063 = vadd.f32 %v1062, %v1048
    %v1064 = vadd.f32 %v1063, %v1049
    %v1065 = vadd.f32 %v1064, %v1050
    %v1066 = vadd.f32 %v1065, %v1051
    %v1067 = vadd.f32 %v1066, %v1052
    %v1068 = vadd.f32 %v1067, %v1053
    %v1069 = vadd.f32 %v1068, %v1054
    %v1070 = vadd.f32 %v1069, %v1055
    %v1071 = vrot.slane %v1070, 4
    %v1072 = vadd.f32 %v1070, %v1071
    %v1073 = vrot.slane %v1072, 2
    %v1074 = vadd.f32 %v1072, %v1073
    %v1075 = vrot.slane %v1074, 1
    %v1076 = vadd.f32 %v1074, %v1075
    %s1077 = sld [smem:[#allocation2]]
    %v1078 = vstv %s1077
    %v1079 = vadd.f32 %v1076, %v1078
    %1080 = vst [vmem:[#allocation3] sm:$0x1] %v1079
    // Predicated region
    $region30: #{tpu_custom_call.1} parent=1 // pred_check
      _
    $region31: #{tpu_custom_call.1} parent=1 // pred_check_branch
      %1082 = sbr.rel (0) target = $region33
    $region32: #{tpu_custom_call.1} parent=1 // pred_region
      %s1084 = ssub.s32 16, 16
      %1085 = vsyncadd [#allocation4], %s1084
      %s1087 = sshll.u32 [#allocation3], 4
      %s1088 = int_to_ptr.vmem [resolvable:$true] %s1087
      %1090 = dma.vmem_to_hbm [thread:$0]  %s1088, 16, %s7, [#allocation4]
    $region33: #{tpu_custom_call.1} parent=1 // pred_fallthru
      _
    // Predicated region
    $region34: #{tpu_custom_call.1} parent=1 // pred_check
      _
    $region35: #{tpu_custom_call.1} parent=1 // pred_check_branch
      %1092 = sbr.rel (0) target = $region37
    $region36: #{tpu_custom_call.1} parent=1 // pred_region
      %1093 = dma.done [#allocation4], 16
    $region37: #{tpu_custom_call.1} parent=1 // pred_fallthru
      _
    %1094 = vsyncpa [#allocation4], 1

</llo_original>
